<compile_context>
chip_gen: v6e
topology: v6e:2x2x1
jax: 0.10.0
libtpu: 0.0.40
codegen_flags: <defaults>
</compile_context>

<pallas_src>
import functools

import numpy as np
import jax
import jax.numpy as jnp
from jax import lax
from jax.experimental import pallas as pl
from jax.experimental.pallas import tpu as pltpu


def _round_up(x: int, m: int) -> int:
    return ((x + m - 1) // m) * m


def _cdiv(a: int, b: int) -> int:
    return (a + b - 1) // b


# ----------------------------------------------------------------------------
# FEM setup (pure NumPy, mirrors FEMEngine.__init__ for nsd=2, fem_basis_deg=1)
# ----------------------------------------------------------------------------
class FEMEngineJAX:
    def __init__(self, **kwargs):
        self.nsd = kwargs.get("nsd", 2)
        self.domain_length = kwargs.get("domain_length", 1.0)
        self.domain_size = kwargs.get("domain_size", 64)
        self.domain_lengths_nd = kwargs.get(
            "domain_lengths",
            (self.domain_length, self.domain_length, self.domain_length))
        self.domain_sizes_nd = kwargs.get(
            "domain_sizes",
            (self.domain_size, self.domain_size, self.domain_size))
        self.domain_lengthX = self.domain_lengths_nd[0]
        self.domain_lengthY = self.domain_lengths_nd[1]
        self.domain_sizeX = self.domain_sizes_nd[0]
        self.domain_sizeY = self.domain_sizes_nd[1]

        self.ngp_1d = kwargs.get("ngp_1d", 2)
        self.fem_basis_deg = kwargs.get("fem_basis_deg", 1)
        if self.fem_basis_deg == 1:
            ngp_1d = 2
        elif self.fem_basis_deg in (2, 3):
            ngp_1d = 3
        else:
            raise ValueError("Unsupported fem_basis_deg")
        if ngp_1d > self.ngp_1d:
            self.ngp_1d = ngp_1d
        self.ngp_total = self.ngp_1d ** self.nsd

        self.gpx_1d, self.gpw_1d = self.gauss_quadrature_scheme(self.ngp_1d)

        self.nelemX = (self.domain_sizeX - 1) // self.fem_basis_deg
        self.nelemY = (self.domain_sizeY - 1) // self.fem_basis_deg
        self.nelem = (self.domain_size - 1) // self.fem_basis_deg
        self.hx = self.domain_lengthX / self.nelemX
        self.hy = self.domain_lengthY / self.nelemY
        self.h = self.domain_length / self.nelem

        if self.fem_basis_deg == 1:
            self.nbf_1d = 2
            self.nbf_total = self.nbf_1d ** self.nsd
            self.bf_1d = lambda x: np.array([0.5 * (1.0 - x), 0.5 * (1.0 + x)])
            self.bf_1d_der = lambda x: np.array([-0.5, 0.5])
        else:
            # TODO(synk): quadratic/cubic bases (conv stride = nbf_1d - 1 > 1)
            # are not implemented in the Pallas path.
            raise NotImplementedError("Pallas demo restricted to the linear basis")

        bx = [self.bf_1d(self.gpx_1d[i]) for i in range(self.ngp_1d)]
        by = [self.bf_1d(self.gpx_1d[j]) for j in range(self.ngp_1d)]
        dbx = [self.bf_1d_der(self.gpx_1d[i]) * (2.0 / self.hx)
               for i in range(self.ngp_1d)]
        dby = [self.bf_1d_der(self.gpx_1d[j]) * (2.0 / self.hy)
               for j in range(self.ngp_1d)]

        # Dense 2-D kernels (same layout/order as the torch module's N_gp /
        # dN_x_gp / dN_y_gp buffers) -- used only for the conv reference check.
        N_list, dNx_list, dNy_list = [], [], []
        for jgp in range(self.ngp_1d):        # y Gauss point (kernel rows)
            for igp in range(self.ngp_1d):    # x Gauss point (kernel cols)
                N_list.append(np.outer(by[jgp], bx[igp]))
                dNx_list.append(np.outer(by[jgp], dbx[igp]))
                dNy_list.append(np.outer(dby[jgp], bx[igp]))
        self.N_gp = np.stack(N_list).astype(np.float32)       # (G, kh, kw)
        self.dN_x_gp = np.stack(dNx_list).astype(np.float32)  # (G, kh, kw)
        self.dN_y_gp = np.stack(dNy_list).astype(np.float32)  # (G, kh, kw)

        # --- separable + deduplicated evaluation plan -----------------------
        # Channel (jgp*ngp+igp) of each output is the VALID cross-correlation
        # of the field with outer(y_taps, x_taps).  For the linear basis the
        # derivative 1-D filters are Gauss-point independent, so only 3
        # distinct x filters and 8 of the 12 (x-filter, y-taps) pairs remain.
        def chan_factors(x_list, y_list):
            fac = []
            for jgp in range(self.ngp_1d):
                for igp in range(self.ngp_1d):
                    fac.append((np.asarray(x_list[igp], np.float64),
                                np.asarray(y_list[jgp], np.float64)))
            return fac

        xkeys, xfilters = [], []

        def xindex(xf):
            key = tuple(np.round(xf, 12).tolist())
            if key in xkeys:
                return xkeys.index(key)
            xkeys.append(key)
            xfilters.append(tuple(float(v) for v in xf))
            return len(xfilters) - 1

        def build_plan(fac):
            order, groups = [], {}
            for c, (xf, yf) in enumerate(fac):
                f = xindex(xf)
                gk = (f, tuple(np.round(yf, 12).tolist()))
                if gk not in groups:
                    groups[gk] = (f, tuple(float(v) for v in yf), [])
                    order.append(gk)
                groups[gk][2].append(c)
            return tuple((f, wy, tuple(ch))
                         for f, wy, ch in (groups[k] for k in order))

        self.plans = (build_plan(chan_factors(bx, by)),    # u at Gauss pts
                      build_plan(chan_factors(dbx, by)),   # du/dx at Gauss pts
                      build_plan(chan_factors(bx, dby)))   # du/dy at Gauss pts
        self.wx_1d = tuple(xfilters)   # distinct 1-D x filters (3 for linear)

    @staticmethod
    def gauss_quadrature_scheme(ngp_1d):
        if ngp_1d == 2:
            return (np.array([-0.5773502691896258, 0.5773502691896258]),
                    np.array([1.0, 1.0]))
        if ngp_1d == 3:
            return (np.array([-0.774596669, 0.0, 0.774596669]),
                    np.array([5.0 / 9.0, 8.0 / 9.0, 5.0 / 9.0]))
        raise ValueError("Unsupported number of Gauss points")


# ----------------------------------------------------------------------------
# One-time cached probe: pin down pltpu.roll's rotate direction on the lane
# and sublane axes (one tiny kernel per process; keeps the stencil robust to
# either rotate convention across Pallas versions).
# ----------------------------------------------------------------------------
@functools.lru_cache(maxsize=None)
def _roll_signs():
    def probe(x_ref, o_lane_ref, o_sub_ref):
        o_lane_ref[...] = pltpu.roll(x_ref[...], shift=1, axis=1)
        o_sub_ref[...] = pltpu.roll(x_ref[...], shift=1, axis=0)

    x = (lax.broadcasted_iota(jnp.float32, (8, 128), 0) * 1000.0
         + lax.broadcasted_iota(jnp.float32, (8, 128), 1))
    y_lane, y_sub = pl.pallas_call(
        probe,
        out_shape=(jax.ShapeDtypeStruct((8, 128), jnp.float32),
                   jax.ShapeDtypeStruct((8, 128), jnp.float32)))(x)
    y_lane = np.asarray(y_lane)
    y_sub = np.asarray(y_sub)
    if y_lane[0, 1] == 0.0:        # jnp.roll convention (data -> higher index)
        lane_sign = -1
    elif y_lane[0, 1] == 2.0:
        lane_sign = +1
    else:
        raise RuntimeError("could not determine pltpu.roll lane direction")
    if y_sub[1, 0] == 0.0:
        sub_sign = -1
    elif y_sub[1, 0] == 2000.0:
        sub_sign = +1
    else:
        raise RuntimeError("could not determine pltpu.roll sublane direction")
    return lane_sign, sub_sign


# ----------------------------------------------------------------------------
# Generation-aware VMEM budgeting and output-row tile selection.
# ----------------------------------------------------------------------------
def _vmem_budgets():
    """(tile budget, vmem_limit_bytes): ~35% / 75% of physical per-core VMEM
    (v5e/v6e 128 MiB -> ~45/96 MiB; v7x 64 MiB per TensorCore -> ~22/48 MiB)."""
    try:
        cap = getattr(pltpu.get_tpu_info(), "vmem_capacity_bytes", None)
    except Exception:
        cap = None
    if not cap:
        cap = 64 * 1024 * 1024          # conservative fallback (v7x per-TC)
    budget = min(int(cap * 0.35), 56 * 1024 * 1024)
    limit = min(int(cap * 0.75), 100 * 1024 * 1024)
    return budget, limit


def _choose_row_tile(ho8, w_pad, total_channels, out_itemsize, budget_bytes):
    """Largest 8-aligned output-row tile whose per-step VMEM footprint
    (double-buffered input main block + double-buffered output blocks + ~14
    live f32 slab temporaries + the 8-row halo blocks) fits the budget."""
    per_row = w_pad * (2 * 4 + 2 * total_channels * out_itemsize + 14 * 4)
    fixed = 2 * 8 * w_pad * 4
    tile = max(budget_bytes - fixed, per_row * 8) // per_row // 8 * 8
    return int(max(8, min(ho8, tile)))


# ----------------------------------------------------------------------------
# Pallas kernel: separable, deduplicated per-Gauss-point evaluation on one
# output-row tile with an 8-row bottom halo.
# ----------------------------------------------------------------------------
def _make_separable_kernel(wx, plans, *, kh, kw, row_tile, w_pad,
                           lane_sign, sub_sign):
    assert kh == 2 and kw == 2, "Pallas path supports the linear basis only"
    nxf = len(wx)
    lane_shift = (lane_sign * 1) % w_pad      # column +1 lane rotate amount
    sub_shift = (sub_sign * 1) % row_tile     # row +1 sublane rotate amount

    def kernel(x_ref, halo_ref, *out_refs):
        # x_ref:    (1, row_tile, w_pad)  input rows [r*row_tile, (r+1)*row_tile)
        # halo_ref: (1, 8, w_pad)         input rows [(r+1)*row_tile, ... + 8)
        # out_refs: 3 x (1, G, row_tile, w_pad)  (N, dN_x, dN_y), lane-dense
        xs = x_ref[0].astype(jnp.float32)            # rows i
        halo = halo_ref[0].astype(jnp.float32)

        # rows i+1: sublane rotate (XLU) + fix the wrapped last row with the
        # first halo row (avoids a slab-sized unaligned-slice VMEM copy).
        rolled = pltpu.roll(xs, shift=sub_shift, axis=0)
        halo_row = jnp.broadcast_to(halo[0:1, :], (row_tile, w_pad))
        last_row = (lax.broadcasted_iota(jnp.int32, (row_tile, w_pad), 0)
                    == (row_tile - 1))
        xs1 = jnp.where(last_row, halo_row, rolled)

        # columns j+1: lane rotate (XLU).  The wrapped lane only pollutes
        # output column w_pad-1 (>= Wo), which is padding anyway.
        xsA = (xs, pltpu.roll(xs, shift=lane_shift, axis=1))
        xsB = (xs1, pltpu.roll(xs1, shift=lane_shift, axis=1))

        # Separable 1-D x passes, one per *distinct* x filter, for the
        # "row i" and "row i+1" slabs.  Weights are compile-time immediates.
        xpA = [xsA[0] * wx[f][0] + xsA[1] * wx[f][1] for f in range(nxf)]
        xpB = [xsB[0] * wx[f][0] + xsB[1] * wx[f][1] for f in range(nxf)]

        # y combine: one evaluation per distinct (x-filter, y-taps) group,
        # stored to every channel that shares it (linear-basis dedup: only
        # 8 of the 12 channels are distinct).
        for o_ref, plan in zip(out_refs, plans):
            for f, wy, chans in plan:
                v = (xpA[f] * wy[0] + xpB[f] * wy[1]).astype(o_ref.dtype)
                for c in chans:
                    o_ref[0, c] = v

    return kernel


def gauss_pt_eval_all_pallas(x_nchw, wx, plans, *, nbf_1d, out_dtype=None,
                             padded=False):
    """Fused all-Gauss-point evaluation of (u, du/dx, du/dy).

    Channel (jgp*ngp+igp) of each output equals the stride-1 'VALID'
    cross-correlation of x with the corresponding FEM tensor-product kernel,
    matching F.conv2d in the torch module.

    Returns ((u_gp, u_x_gp, u_y_gp), (Ho, Wo)).  With padded=True the raw
    (B, G, ho_pad, w_pad) buffers are returned zero-copy; rows >= Ho and
    columns >= Wo then contain halo / zero-padding garbage that consumers
    must ignore.
    """
    B, C, H, W = x_nchw.shape
    assert C == 1, "FEM field has a single channel"
    stride = nbf_1d - 1
    if stride != 1:
        # TODO(synk): strided Gauss-point evaluation (fem_basis_deg > 1) is not
        # implemented in the Pallas path.
        raise NotImplementedError("Pallas path supports the linear basis only")
    kh = kw = nbf_1d

    # bf16 stores by default (HBM-write-bound kernel); accumulation stays f32.
    out_dtype = jnp.bfloat16 if out_dtype is None else out_dtype
    oisz = np.dtype(out_dtype).itemsize

    Ho = (H - kh) // stride + 1
    Wo = (W - kw) // stride + 1
    gouts = tuple(sum(len(g[2]) for g in plan) for plan in plans)
    total_ch = sum(gouts)
    nxf = len(wx)

    # Lane-dense output: pad width to a multiple of 128 so every store is a
    # full, unmasked vst.
    # TODO(synk): for W <= 64, pack several batch elements side by side in the
    # lane dimension instead of padding (halves wasted store bandwidth).
    w_pad = _round_up(W, 128)

    budget, vmem_limit = _vmem_budgets()
    ho8 = _round_up(max(Ho, 8), 8)
    row_tile = _choose_row_tile(ho8, w_pad, total_ch, oisz, budget)
    n_row_blocks = _cdiv(ho8, row_tile)
    # Keep >= 2 grid cells when possible so both v7x TensorCores get work.
    if B * n_row_blocks < 2 and ho8 >= 16:
        row_tile = max(8, _round_up(_cdiv(ho8, 2), 8))
        n_row_blocks = _cdiv(ho8, row_tile)
    ho_pad = n_row_blocks * row_tile
    h_pad = ho_pad + 8                    # 8-row bottom halo (zero padded)
    rbf = row_tile // 8

    x = x_nchw.reshape(B, H, W)
    x = jnp.pad(x, ((0, 0), (0, h_pad - H), (0, w_pad - W)))

    lane_sign, sub_sign = _roll_signs()
    kernel = _make_separable_kernel(
        wx, plans, kh=kh, kw=kw, row_tile=row_tile, w_pad=w_pad,
        lane_sign=lane_sign, sub_sign=sub_sign)

    n_groups = sum(len(plan) for plan in plans)
    flops = int(2 * B * ho_pad * w_pad * (2 * nxf * kw + n_groups * kh))
    bytes_accessed = int(
        x.dtype.itemsize * B * (ho_pad + 8 * n_row_blocks) * w_pad
        + oisz * B * total_ch * ho_pad * w_pad)

    outs = pl.pallas_call(
        kernel,
        out_shape=tuple(jax.ShapeDtypeStruct((B, g, ho_pad, w_pad), out_dtype)
                        for g in gouts),
        grid_spec=pltpu.PrefetchScalarGridSpec(
            num_scalar_prefetch=0,
            grid=(B, n_row_blocks),
            in_specs=[
                # Main row block and its 8-row bottom halo: two auto-pipelined
                # BlockSpecs over the same padded field, so input VMEM is
                # O(row_tile) and the DMA overlaps compute.
                pl.BlockSpec((1, row_tile, w_pad), lambda b, r: (b, r, 0)),
                pl.BlockSpec((1, 8, w_pad), lambda b, r: (b, (r + 1) * rbf, 0)),
            ],
            out_specs=[
                # TODO(synk): on v5e, try pipeline_mode=pl.Buffered(3) here if
                # xprof shows exposed output writeback.
                pl.BlockSpec((1, g, row_tile, w_pad), lambda b, r: (b, 0, r, 0))
                for g in gouts
            ],
        ),
        compiler_params=pltpu.CompilerParams(
            dimension_semantics=("parallel", "parallel"),
            vmem_limit_bytes=int(vmem_limit),
        ),
        cost_estimate=pl.CostEstimate(flops=flops, transcendentals=0,
                                      bytes_accessed=bytes_accessed),
    )(x, x)

    if padded:
        return outs, (Ho, Wo)
    # Semantics-preserving default; production consumers should use
    # padded=True (or fuse this slice with downstream ops inside one jit).
    return tuple(o[:, :, :Ho, :Wo] for o in outs), (Ho, Wo)


# ----------------------------------------------------------------------------
# "Forward": Gauss-point evaluation of the field and its x/y derivatives
# (FEMEngine.forward is abstract; this is the compute the module exposes via
# gauss_pt_evaluation / gauss_pt_evaluation_der_x / gauss_pt_evaluation_der_y).
# ----------------------------------------------------------------------------
def fem_forward(engine, x_nchw, out_dtype=None, padded=False):
    (u, ux, uy), _ = gauss_pt_eval_all_pallas(
        x_nchw, engine.wx_1d, engine.plans, nbf_1d=engine.nbf_1d,
        out_dtype=out_dtype, padded=padded)
    return u, ux, uy


# Pure-JAX reference (matches F.conv2d semantics: cross-correlation, stride=1).
def gauss_pt_eval_ref(x_nchw, weights):
    w = weights[:, None, :, :]  # (G, 1, kh, kw) == (O, I, kH, kW)
    return lax.conv_general_dilated(
        x_nchw, w, window_strides=(1, 1), padding="VALID",
        dimension_numbers=("NCHW", "OIHW", "NCHW"))


if __name__ == "__main__":
    # Small deterministic setup consistent with the module:
    # nsd=2, fem_basis_deg=1 -> nbf_1d=2, ngp_1d=2, ngp_total=4, stride=1.
    engine = FEMEngineJAX(nsd=2, domain_size=16, domain_length=1.0,
                          fem_basis_deg=1)

    key = jax.random.PRNGKey(0)
    B, H, W = 2, engine.domain_sizeY, engine.domain_sizeX
    x = jax.random.normal(key, (B, 1, H, W), dtype=jnp.float32)  # NCHW

    # Reference: plain-JAX conv with the dense 2-D FEM kernels.
    w_all = jnp.asarray(np.concatenate(
        [engine.N_gp, engine.dN_x_gp, engine.dN_y_gp], axis=0))
    ref = np.asarray(gauss_pt_eval_ref(x, w_all))
    G = engine.ngp_total

    # Exact check: f32 stores.
    u, ux, uy = fem_forward(engine, x, out_dtype=jnp.float32)
    jax.block_until_ready((u, ux, uy))
    got = np.concatenate([np.asarray(u), np.asarray(ux), np.asarray(uy)],
                         axis=1)
    assert got.shape == (B, 3 * G, H - 1, W - 1), got.shape
    np.testing.assert_allclose(got, ref, rtol=1e-5, atol=1e-5)

    # Default production path: bf16 stores (f32 accumulation), loose tolerance.
    ub, uxb, uyb = fem_forward(engine, x)
    jax.block_until_ready((ub, uxb, uyb))
    gotb = np.concatenate([np.asarray(ub.astype(jnp.float32)),
                           np.asarray(uxb.astype(jnp.float32)),
                           np.asarray(uyb.astype(jnp.float32))], axis=1)
    np.testing.assert_allclose(gotb, ref, rtol=2e-2, atol=2e-2)

    print("KERNEL_OK")
</pallas_src>

<mosaic_0001>
module attributes {stable_mosaic.version = 11 : i64} {
  func.func @probe(%arg0: memref<8x128xf32, #tpu.memory_space<vmem>>, %arg1: memref<8x128xf32, #tpu.memory_space<vmem>>, %arg2: memref<8x128xf32, #tpu.memory_space<vmem>>) attributes {dimension_semantics = [], scalar_prefetch = 0 : i64, scratch_operands = 0 : i64, tpu.core_type = #tpu.core_type<tc>} {
    %c0 = arith.constant 0 : index
    %c0_0 = arith.constant 0 : index
    %0 = vector.load %arg0[%c0, %c0_0] : memref<8x128xf32, #tpu.memory_space<vmem>>, vector<8x128xf32>
    %c1_i32 = arith.constant 1 : i32
    %1 = tpu.dynamic_rotate %0 by %c1_i32 dim 1 : vector<8x128xf32>, i32 -> vector<8x128xf32>
    %c0_1 = arith.constant 0 : index
    %c0_2 = arith.constant 0 : index
    %2 = vector.load %arg1[%c0_1, %c0_2] : memref<8x128xf32, #tpu.memory_space<vmem>>, vector<8x128xf32>
    tpu.vector_store %arg1[%c0_1, %c0_2], %1 {strides = array<i32>} : memref<8x128xf32, #tpu.memory_space<vmem>>, vector<8x128xf32>,
    %c0_3 = arith.constant 0 : index
    %c0_4 = arith.constant 0 : index
    %3 = vector.load %arg0[%c0_3, %c0_4] : memref<8x128xf32, #tpu.memory_space<vmem>>, vector<8x128xf32>
    %c1_i32_5 = arith.constant 1 : i32
    %4 = tpu.dynamic_rotate %3 by %c1_i32_5 dim 0 : vector<8x128xf32>, i32 -> vector<8x128xf32>
    %c0_6 = arith.constant 0 : index
    %c0_7 = arith.constant 0 : index
    %5 = vector.load %arg2[%c0_6, %c0_7] : memref<8x128xf32, #tpu.memory_space<vmem>>, vector<8x128xf32>
    tpu.vector_store %arg2[%c0_6, %c0_7], %4 {strides = array<i32>} : memref<8x128xf32, #tpu.memory_space<vmem>>, vector<8x128xf32>,
    return
  }
}

</mosaic_0001>

<llo_original>
// kernel: tpu_custom_call.1
$region0: #{tpu_custom_call.1}
  #allocation0 [shape = 'u32[]', space=smem, size = 0x4, offset = 0x4, fixed_abs, tag = 'smem constant byte address 0x4 - core index']
  #allocation1 [shape = 'u32[144,128]{1,0:T(1,128)}', space=vmem, size = 0x12000, scoped, tag = 'internal scratch']
  %s0 = inlined_call_operand.hbm [shape: f32[8,128], index: 0, kind: input, shape index: {}]
  %s1 = inlined_call_operand.hbm [shape: f32[8,128], index: 1, kind: output, shape index: {0}]
  %s2 = inlined_call_operand.hbm [shape: f32[8,128], index: 2, kind: output, shape index: {1}]
  %3 = xla_tuple %s1, %s2
  %s4 = sld [smem:[#allocation0]]
  $region26: #{tpu_custom_call.1} parent=0
    _
  %s6 = ssub.s32 1, %s4
  %s7 = scalar_select 0, %s6, %s4
  $region1: #{tpu_custom_call.1} parent=0
    #allocation2 [shape = 'u8[4096]{0}', space=vmem, size = 0x1000, scoped, tag = 'input window, operand 0, single buffered']
    #allocation3 [shape = 's32[1]{0}', space=sflag, size = 0x4, scoped, tag = 'scoped memory for tpu_custom_call.1']
    #allocation4 [shape = 's32[1]{0}', space=sflag, size = 0x4, scoped, tag = 'scoped memory for tpu_custom_call.1']
    #allocation5 [shape = 'u8[4096]{0}', space=vmem, size = 0x1000, scoped, tag = 'output window, operand 0, single buffered']
    #allocation6 [shape = 'u8[4096]{0}', space=vmem, size = 0x1000, scoped, tag = 'output window, operand 1, single buffered']
    #allocation7 [shape = 's32[1]{0}', space=sflag, size = 0x4, scoped, tag = 'scoped memory for tpu_custom_call.1']
    %8 = vsyncpa [#allocation3], 0
    %9 = vsyncpa [#allocation4], 0
    %10 = vsyncpa [#allocation7], 0
    // Predicated region
    $region2: #{tpu_custom_call.1} parent=1 // pred_check
      _
    $region3: #{tpu_custom_call.1} parent=1 // pred_check_branch
      %12 = sbr.rel (0) target = $region5
    $region4: #{tpu_custom_call.1} parent=1 // pred_region
      %s14 = ssub.s32 128, 128
      %15 = vsyncadd [#allocation3], %s14
      %s17 = sshll.u32 [#allocation2], 4
      %s18 = int_to_ptr.vmem [resolvable:$true] %s17
      %20 = dma.hbm_to_vmem [thread:$0]  %s0, 128, %s18, [#allocation3]
    $region5: #{tpu_custom_call.1} parent=1 // pred_fallthru
      _
    // Predicated region
    $region6: #{tpu_custom_call.1} parent=1 // pred_check
      _
    $region7: #{tpu_custom_call.1} parent=1 // pred_check_branch
      %22 = sbr.rel (0) target = $region9
    $region8: #{tpu_custom_call.1} parent=1 // pred_region
      %23 = dma.done [#allocation3], 128
    $region9: #{tpu_custom_call.1} parent=1 // pred_fallthru
      _
    %v24 = vld [vmem:[#allocation2] sm:$0xff]
    %25 = vrot.lane.b32.xlu0 %v24, 1
    %v26 = vpop.permute.xlu0 %25
    %27 = vst [vmem:[#allocation5] sm:$0xff] %v26
    %v28 = vld [vmem:[#allocation2] sm:$0xff]
    %v29 = vrot.slane %v28, 7
    %30 = vst [vmem:[#allocation6] sm:$0xff] %v29
    // Predicated region
    $region10: #{tpu_custom_call.1} parent=1 // pred_check
      _
    $region11: #{tpu_custom_call.1} parent=1 // pred_check_branch
      %32 = sbr.rel (0) target = $region13
    $region12: #{tpu_custom_call.1} parent=1 // pred_region
      %s34 = ssub.s32 128, 128
      %35 = vsyncadd [#allocation4], %s34
      %s37 = sshll.u32 [#allocation5], 4
      %s38 = int_to_ptr.vmem [resolvable:$true] %s37
      %40 = dma.vmem_to_hbm [thread:$0]  %s38, 128, %s1, [#allocation4]
    $region13: #{tpu_custom_call.1} parent=1 // pred_fallthru
      _
    // Predicated region
    $region14: #{tpu_custom_call.1} parent=1 // pred_check
      _
    $region15: #{tpu_custom_call.1} parent=1 // pred_check_branch
      %42 = sbr.rel (0) target = $region17
    $region16: #{tpu_custom_call.1} parent=1 // pred_region
      %s44 = ssub.s32 128, 128
      %45 = vsyncadd [#allocation7], %s44
      %s47 = sshll.u32 [#allocation6], 4
      %s48 = int_to_ptr.vmem [resolvable:$true] %s47
      %50 = dma.vmem_to_hbm [thread:$0]  %s48, 128, %s2, [#allocation7]
    $region17: #{tpu_custom_call.1} parent=1 // pred_fallthru
      _
    // Predicated region
    $region18: #{tpu_custom_call.1} parent=1 // pred_check
      _
    $region19: #{tpu_custom_call.1} parent=1 // pred_check_branch
      %52 = sbr.rel (0) target = $region21
    $region20: #{tpu_custom_call.1} parent=1 // pred_region
      %53 = dma.done [#allocation4], 128
    $region21: #{tpu_custom_call.1} parent=1 // pred_fallthru
      _
    // Predicated region
    $region22: #{tpu_custom_call.1} parent=1 // pred_check
      _
    $region23: #{tpu_custom_call.1} parent=1 // pred_check_branch
      %55 = sbr.rel (0) target = $region25
    $region24: #{tpu_custom_call.1} parent=1 // pred_region
      %56 = dma.done [#allocation7], 128
    $region25: #{tpu_custom_call.1} parent=1 // pred_fallthru
      _
    %57 = vsyncpa [#allocation3], 1
    %58 = vsyncpa [#allocation4], 1
    %59 = vsyncpa [#allocation7], 1

</llo_original>
